<compile_context>
chip_gen: v7x
topology: tpu7x:2x2x1
jax: 0.10.0
libtpu: 0.0.40
codegen_flags: <defaults>
</compile_context>

<pallas_src>
import numpy as np
import jax
import jax.numpy as jnp
from jax.experimental import pallas as pl
from jax.experimental.pallas import tpu as pltpu


# ----------------------------------------------------------------------------
# PIL bicubic coefficient construction (exact port of _imaging.c precompute)
# ----------------------------------------------------------------------------
def _bicubic(x: np.ndarray) -> np.ndarray:
    a = -0.5
    x = np.abs(x)
    out = np.zeros_like(x)
    m1 = x < 1.0
    m2 = (x >= 1.0) & (x < 2.0)
    out[m1] = ((a + 2.0) * x[m1] - (a + 3.0)) * x[m1] * x[m1] + 1.0
    out[m2] = (((x[m2] - 5.0) * x[m2] + 8.0) * x[m2] - 4.0) * a
    return out


def _resample_matrix(in_size: int, out_size: int) -> np.ndarray:
    """Dense (out_size, in_size) matrix equivalent to PIL's per-row coeff table."""
    support0 = 2.0  # bicubic support
    scale = in_size / out_size
    filterscale = max(scale, 1.0)
    support = support0 * filterscale
    ss = 1.0 / filterscale

    mat = np.zeros((out_size, in_size), dtype=np.float64)
    for xx in range(out_size):
        center = (xx + 0.5) * scale
        xmin = int(max(0.0, np.floor(center - support)))
        xmax = int(min(float(in_size), np.ceil(center + support)))
        idx = np.arange(xmin, xmax)
        w = _bicubic((idx - center + 0.5) * ss)
        wsum = w.sum()
        if wsum != 0.0:
            w = w / wsum
        mat[xx, xmin:xmax] = w
    return mat.astype(np.float32)


# ----------------------------------------------------------------------------
# Block-size (planes per grid step) selection
# ----------------------------------------------------------------------------
def _pick_block_planes(p, h_in, w_in, h_out, w_out,
                       vmem_budget_bytes=40 * 1024 * 1024):
    """How many (n, c) planes to process per grid step."""
    if p <= 0:
        return 1
    # keep >= 2 grid steps when possible so both v7x TensorCores get work
    bt_cap = p if p < 2 else -(-p // 2)
    # target >= 256 MXU rows (BT*H_in) and >= 256 output lanes (BT*W_out)
    bt_target = max(-(-256 // max(h_in, 1)), -(-256 // max(w_out, 1)), 8)
    bt = max(1, min(bt_target, bt_cap))

    def est(b):
        x_blk = 2 * b * h_in * w_in * 4            # double-buffered input block
        o_blk = 2 * b * h_out * w_out * 4          # double-buffered output block
        wts = 2 * (h_out * h_in + w_in * w_out) * 4
        interm = 2 * b * max(h_in * w_out, h_out * w_in) * 4
        return x_blk + o_blk + wts + interm

    while bt > 1 and est(bt) > vmem_budget_bytes:
        bt -= 1
    return bt


# ----------------------------------------------------------------------------
# Pallas kernels: BT planes per grid step, two big MXU matmuls each
# ----------------------------------------------------------------------------
def _resize_hfirst_kernel(x_ref, wwt_ref, wh_ref, o_ref):
    # x_ref  : (BT, H_in, W_in)     planes stacked along rows
    # wwt_ref: (W_in, W_out)
    # wh_ref : (H_out, H_in)
    # o_ref  : (1, H_out, BT*W_out) lane-dense output slab
    bt, h_in, w_in = x_ref.shape
    # horizontal pass (PIL's first pass): one (BT*H_in, W_in) @ (W_in, W_out)
    xs = x_ref[...].reshape(bt * h_in, w_in)
    tmp = jnp.dot(xs, wwt_ref[...], preferred_element_type=jnp.float32)
    # repack planes along lanes -> (H_in, BT*W_out)
    wide = jnp.concatenate(
        [tmp[b * h_in:(b + 1) * h_in, :] for b in range(bt)], axis=1)
    # vertical pass: one (H_out, H_in) @ (H_in, BT*W_out), lane-dense store
    o_ref[0] = jnp.dot(wh_ref[...], wide, preferred_element_type=jnp.float32)


def _resize_vfirst_kernel(x_ref, wh_ref, wwt_ref, o_ref):
    # x_ref  : (1, H_in, BT*W_in)   planes packed along lanes (host-prepared)
    # wh_ref : (H_out, H_in)
    # wwt_ref: (W_in, W_out)
    # o_ref  : (BT, H_out, W_out)
    h_out, _ = wh_ref.shape
    w_in, w_out = wwt_ref.shape
    bt = o_ref.shape[0]
    # vertical pass: one (H_out, H_in) @ (H_in, BT*W_in) matmul
    t = jnp.dot(wh_ref[...], x_ref[0], preferred_element_type=jnp.float32)
    # repack planes along rows -> (BT*H_out, W_in)
    tall = jnp.concatenate(
        [t[:, b * w_in:(b + 1) * w_in] for b in range(bt)], axis=0)
    # horizontal pass: one (BT*H_out, W_in) @ (W_in, W_out) matmul
    out = jnp.dot(tall, wwt_ref[...], preferred_element_type=jnp.float32)
    o_ref[...] = out.reshape(bt, h_out, w_out)


# ----------------------------------------------------------------------------
# Wrapper
# ----------------------------------------------------------------------------
def pil_resize(x: jax.Array, size=(256, 256)) -> jax.Array:
    """Bicubic resize of NCHW float32 x to spatial `size` = (H_out, W_out)."""
    n, c, h_in, w_in = x.shape
    h_out, w_out = size
    p = n * c

    wh = jnp.asarray(_resample_matrix(h_in, h_out))        # (H_out, H_in)
    wwt = jnp.asarray(_resample_matrix(w_in, w_out).T)     # (W_in, W_out)

    bt = _pick_block_planes(p, h_in, w_in, h_out, w_out)
    steps = -(-p // bt)
    p_pad = steps * bt

    x_flat = x.reshape(p, h_in, w_in).astype(jnp.float32)
    if p_pad != p:
        x_flat = jnp.pad(x_flat, ((0, p_pad - p), (0, 0), (0, 0)))

    # pick the pass order with fewer MACs (horizontal-first = PIL's order on ties)
    macs_hfirst = h_in * w_out * (w_in + h_out)
    macs_vfirst = h_out * w_in * (h_in + w_out)
    cost = pl.CostEstimate(
        flops=2 * p_pad * min(macs_hfirst, macs_vfirst),
        transcendentals=0,
        bytes_accessed=4 * (p_pad * h_in * w_in + p_pad * h_out * w_out
                            + h_out * h_in + w_in * w_out))
    cparams = pltpu.CompilerParams(
        dimension_semantics=("parallel",),
        vmem_limit_bytes=48 * 1024 * 1024)

    if macs_vfirst < macs_hfirst:
        # vertical-first: lane-pack planes on the host -> lane-dense input slab
        x_packed = (x_flat.reshape(steps, bt, h_in, w_in)
                    .transpose(0, 2, 1, 3)
                    .reshape(steps, h_in, bt * w_in))
        out = pl.pallas_call(
            _resize_vfirst_kernel,
            out_shape=jax.ShapeDtypeStruct((p_pad, h_out, w_out), jnp.float32),
            grid_spec=pltpu.PrefetchScalarGridSpec(
                num_scalar_prefetch=0,
                grid=(steps,),
                in_specs=[
                    pl.BlockSpec((1, h_in, bt * w_in), lambda i: (i, 0, 0)),
                    pl.BlockSpec((h_out, h_in), lambda i: (0, 0)),
                    pl.BlockSpec((w_in, w_out), lambda i: (0, 0)),
                ],
                out_specs=pl.BlockSpec((bt, h_out, w_out), lambda i: (i, 0, 0)),
            ),
            compiler_params=cparams,
            cost_estimate=cost,
        )(x_packed, wh, wwt)
        y_flat = out[:p]
    else:
        # horizontal-first (PIL's order): lane-dense output slab, host un-packs
        out = pl.pallas_call(
            _resize_hfirst_kernel,
            out_shape=jax.ShapeDtypeStruct((steps, h_out, bt * w_out),
                                           jnp.float32),
            grid_spec=pltpu.PrefetchScalarGridSpec(
                num_scalar_prefetch=0,
                grid=(steps,),
                in_specs=[
                    pl.BlockSpec((bt, h_in, w_in), lambda i: (i, 0, 0)),
                    pl.BlockSpec((w_in, w_out), lambda i: (0, 0)),
                    pl.BlockSpec((h_out, h_in), lambda i: (0, 0)),
                ],
                out_specs=pl.BlockSpec((1, h_out, bt * w_out),
                                       lambda i: (i, 0, 0)),
            ),
            compiler_params=cparams,
            cost_estimate=cost,
        )(x_flat, wwt, wh)
        y_flat = (out.reshape(steps, h_out, bt, w_out)
                  .transpose(0, 2, 1, 3)
                  .reshape(p_pad, h_out, w_out)[:p])

    return y_flat.reshape(n, c, h_out, w_out)


if __name__ == "__main__":
    key = jax.random.PRNGKey(0)
    N, C, H, W = 2, 4, 16, 16
    x = jax.random.uniform(key, (N, C, H, W), dtype=jnp.float32)

    def reference(x, size):
        h_out, w_out = size
        wh = jnp.asarray(_resample_matrix(x.shape[2], h_out))
        ww = jnp.asarray(_resample_matrix(x.shape[3], w_out))
        return jnp.einsum("oh,nchw,pw->ncop", wh, x, ww,
                          precision=jax.lax.Precision.HIGHEST)

    # symmetric upscale -> horizontal-first (PIL-order) path
    size1 = (24, 24)
    y1 = jax.block_until_ready(pil_resize(x, size=size1))
    assert y1.shape == (N, C, size1[0], size1[1])
    assert jnp.allclose(y1, reference(x, size1), atol=1e-4, rtol=1e-4)

    # asymmetric resize -> vertical-first path (fewer MXU FLOPs)
    size2 = (8, 32)
    y2 = jax.block_until_ready(pil_resize(x, size=size2))
    assert y2.shape == (N, C, size2[0], size2[1])
    assert jnp.allclose(y2, reference(x, size2), atol=1e-4, rtol=1e-4)

    print("KERNEL_OK")
</pallas_src>

<mosaic_0001>
module attributes {stable_mosaic.version = 11 : i64} {
  func.func @_resize_hfirst_kernel(%arg0: i32, %arg1: memref<4x16x16xf32, #tpu.memory_space<vmem>>, %arg2: memref<16x24xf32, #tpu.memory_space<vmem>>, %arg3: memref<24x16xf32, #tpu.memory_space<vmem>>, %arg4: memref<1x24x96xf32, #tpu.memory_space<vmem>>) attributes {dimension_semantics = [#tpu.dimension_semantics<parallel>], iteration_bounds = array<i64: 2>, scalar_prefetch = 0 : i64, scratch_operands = 0 : i64, tpu.core_type = #tpu.core_type<tc>, window_params = [{transform_indices = @transform_0, window_bounds = array<i64: 4, 16, 16>}, {pipeline_mode = #tpu.pipeline_mode<synchronous>, transform_indices = @transform_1, window_bounds = array<i64: 16, 24>}, {pipeline_mode = #tpu.pipeline_mode<synchronous>, transform_indices = @transform_2, window_bounds = array<i64: 24, 16>}, {transform_indices = @transform_3, window_bounds = array<i64: 1, 24, 96>}]} {
    %c0 = arith.constant 0 : index
    %c0_0 = arith.constant 0 : index
    %c0_1 = arith.constant 0 : index
    %0 = vector.load %arg1[%c0, %c0_0, %c0_1] : memref<4x16x16xf32, #tpu.memory_space<vmem>>, vector<4x16x16xf32>
    %1 = vector.shape_cast %0 : vector<4x16x16xf32> to vector<64x16xf32>
    %c0_2 = arith.constant 0 : index
    %c0_3 = arith.constant 0 : index
    %2 = vector.load %arg2[%c0_2, %c0_3] : memref<16x24xf32, #tpu.memory_space<vmem>>, vector<16x24xf32>
    %cst = arith.constant dense<0.000000e+00> : vector<64x24xf32>
    %3 = tpu.matmul %1, %2, %cst {dimension_numbers = #tpu.dot_dimension_numbers<[1], [0], [0], [1], [0, 0, 1, 1], [], []>} : vector<64x16xf32>, vector<16x24xf32>, vector<64x24xf32> -> vector<64x24xf32>
    %4 = vector.extract_strided_slice %3 {offsets = [0, 0], sizes = [16, 24], strides = [1, 1]} : vector<64x24xf32> to vector<16x24xf32>
    %5 = vector.extract_strided_slice %3 {offsets = [16, 0], sizes = [16, 24], strides = [1, 1]} : vector<64x24xf32> to vector<16x24xf32>
    %6 = vector.extract_strided_slice %3 {offsets = [32, 0], sizes = [16, 24], strides = [1, 1]} : vector<64x24xf32> to vector<16x24xf32>
    %7 = vector.extract_strided_slice %3 {offsets = [48, 0], sizes = [16, 24], strides = [1, 1]} : vector<64x24xf32> to vector<16x24xf32>
    %8 = tpu.concatenate %4, %5, %6, %7 in 1 : vector<16x24xf32>, vector<16x24xf32>, vector<16x24xf32>, vector<16x24xf32> -> vector<16x96xf32>
    %c0_4 = arith.constant 0 : index
    %c0_5 = arith.constant 0 : index
    %9 = vector.load %arg3[%c0_4, %c0_5] : memref<24x16xf32, #tpu.memory_space<vmem>>, vector<24x16xf32>
    %cst_6 = arith.constant dense<0.000000e+00> : vector<24x96xf32>
    %10 = tpu.matmul %9, %8, %cst_6 {dimension_numbers = #tpu.dot_dimension_numbers<[1], [0], [0], [1], [0, 0, 1, 1], [], []>} : vector<24x16xf32>, vector<16x96xf32>, vector<24x96xf32> -> vector<24x96xf32>
    %c0_7 = arith.constant 0 : index
    %c0_8 = arith.constant 0 : index
    %c0_9 = arith.constant 0 : index
    %11 = vector.load %arg4[%c0_7, %c0_8, %c0_9] : memref<1x24x96xf32, #tpu.memory_space<vmem>>, vector<1x24x96xf32>
    %12 = vector.shape_cast %11 : vector<1x24x96xf32> to vector<24x96xf32>
    %13 = vector.shape_cast %10 : vector<24x96xf32> to vector<1x24x96xf32>
    tpu.vector_store %arg4[%c0_7, %c0_8, %c0_9], %13 {strides = array<i32>} : memref<1x24x96xf32, #tpu.memory_space<vmem>>, vector<1x24x96xf32>,
    return
  }
  func.func @transform_0(%arg0: i32) -> (i32, i32, i32) {
    %c0_i32 = arith.constant 0 : i32
    %c0_i32_0 = arith.constant 0 : i32
    %c0_i32_1 = arith.constant 0 : i32
    return %arg0, %c0_i32, %c0_i32_0 : i32, i32, i32
  }
  func.func @transform_1(%arg0: i32) -> (i32, i32) {
    %c0_i32 = arith.constant 0 : i32
    %c0_i32_0 = arith.constant 0 : i32
    %c0_i32_1 = arith.constant 0 : i32
    return %c0_i32, %c0_i32_0 : i32, i32
  }
  func.func @transform_2(%arg0: i32) -> (i32, i32) {
    %c0_i32 = arith.constant 0 : i32
    %c0_i32_0 = arith.constant 0 : i32
    %c0_i32_1 = arith.constant 0 : i32
    return %c0_i32, %c0_i32_0 : i32, i32
  }
  func.func @transform_3(%arg0: i32) -> (i32, i32, i32) {
    %c0_i32 = arith.constant 0 : i32
    %c0_i32_0 = arith.constant 0 : i32
    %c0_i32_1 = arith.constant 0 : i32
    return %arg0, %c0_i32, %c0_i32_0 : i32, i32, i32
  }
}

</mosaic_0001>

<llo_original>
// kernel: tpu_custom_call.1
$region0: #{tpu_custom_call.1}
  #allocation0 [shape = 'u32[]', space=smem, size = 0x4, offset = 0x4, fixed_abs, tag = 'smem constant byte address 0x4 - core index']
  #allocation1 [shape = 'u32[144,128]{1,0:T(1,128)}', space=vmem, size = 0x12000, scoped, tag = 'internal scratch']
  %s0 = inlined_call_operand.hbm [shape: f32[8,16,16], index: 0, kind: input, shape index: {}]
  %s1 = inlined_call_operand.vmem [shape: f32[16,24], index: 1, kind: input, shape index: {}]
  %s2 = inlined_call_operand.vmem [shape: f32[24,16], index: 2, kind: input, shape index: {}]
  %s3 = inlined_call_operand.hbm [shape: f32[2,24,96], index: 3, kind: output, shape index: {}]
  %s4 = sld [smem:[#allocation0]]
  $region49: #{tpu_custom_call.1} parent=0
    _
  %s6 = ssub.s32 1, %s4
  %s7 = scalar_select 0, %s6, %s4
  $region1: #{tpu_custom_call.1} parent=0
    #allocation2 [shape = 'u8[65536]{0}', space=vmem, size = 0x10000, scoped, tag = 'input window, operand 0']
    #allocation3 [shape = 's32[2]{0}', space=sflag, size = 0x8, scoped, tag = 'scoped memory for tpu_custom_call.1']
    #allocation4 [shape = 's32[2]{0}', space=sflag, size = 0x8, scoped, tag = 'scoped memory for tpu_custom_call.1']
    #allocation5 [shape = 'u8[24576]{0}', space=vmem, size = 0x6000, scoped, tag = 'output window, operand 0']
    %8 = vsyncpa [#allocation3], 0
    %s9 = scalar_lea.sflag [#allocation3], 1
    %10 = vsyncpa %s9, 0
    %11 = vsyncpa [#allocation4], 0
    %s12 = scalar_lea.sflag [#allocation4], 1
    %13 = vsyncpa %s12, 0
    loop: start=0, step=1, limit=4
    $region2: #{tpu_custom_call.1} parent=1 // loop_pre_header
      _
    $region3: #{tpu_custom_call.1} parent=1 // loop_header
      %s15 = sphi 0, %s19
      %p16 = scmp.ge.s32.totalorder %s15, 4
      %s25 = sphi 0, %s27
      %s28 = sphi 0, %s25
      %s29 = sphi 0, %s28
      %s45 = sphi 0, %s29
      %s49 = sphi 0, %s49
      %s51 = sphi 0, %s49
      %s52 = sphi 0, %s51
      %s66 = sphi 0, %s52
      %s70 = sphi 0, %s70
      %s72 = sphi 0, %s70
      %s73 = sphi 0, %s72
      %s87 = sphi 0, %s73
      %s93 = sphi 0, %s95
      %s96 = sphi 0, %s93
      %s97 = sphi 0, %s96
      %s113 = sphi 0, %s97
    $region4: #{tpu_custom_call.1} parent=1 // loop_header_branch
      %18 = sbr.rel (%p16) target = $region8
    $region5: #{tpu_custom_call.1} parent=1 // loop_body
      %s20 = ssub.s32 %s15, 1
      %s21 = ssub.s32 %s15, 2
      %s22 = sadd.s32 %s15, 1
      %s23 = ssub.s32 %s15, %s22
      %p24 = scmp.eq.s32.totalorder %s23, 0
      %s26 = sadd.s32 %s25, 1
      %s27 = scalar_select %p24, %s25, %s26
      %p30 = pneg %p24
      %p31 = scmp.eq.s32.totalorder %s15, 1
      %p32 = por %p30, %p31
      %p33 = scmp.ne.s32.totalorder %s25, %s28
      %p34 = scmp.eq.s32.totalorder %s15, 0
      %p35 = por %p33, %p34
      %p36 = scmp.ne.s32.totalorder %s25, %s28
      %p37 = scmp.eq.s32.totalorder %s20, 1
      %p38 = por %p36, %p37
      %p39 = scmp.ne.s32.totalorder %s28, %s29
      %p40 = scmp.eq.s32.totalorder %s20, 0
      %p41 = por %p39, %p40
      %p42 = scmp.ne.s32.totalorder %s28, %s29
      %p43 = scmp.eq.s32.totalorder %s21, 1
      %p44 = por %p42, %p43
      %p46 = scmp.ne.s32.totalorder %s29, %s45
      %p47 = scmp.eq.s32.totalorder %s21, 0
      %p48 = por %p46, %p47
      %s50 = sadd.s32 %s49, 1
      %p53 = scmp.eq.s32.totalorder %s15, 1
      %p54 = scmp.ne.s32.totalorder %s49, %s51
      %p55 = scmp.eq.s32.totalorder %s15, 0
      %p56 = por %p54, %p55
      %p57 = scmp.ne.s32.totalorder %s49, %s51
      %p58 = scmp.eq.s32.totalorder %s20, 1
      %p59 = por %p57, %p58
      %p60 = scmp.ne.s32.totalorder %s51, %s52
      %p61 = scmp.eq.s32.totalorder %s20, 0
      %p62 = por %p60, %p61
      %p63 = scmp.ne.s32.totalorder %s51, %s52
      %p64 = scmp.eq.s32.totalorder %s21, 1
      %p65 = por %p63, %p64
      %p67 = scmp.ne.s32.totalorder %s52, %s66
      %p68 = scmp.eq.s32.totalorder %s21, 0
      %p69 = por %p67, %p68
      %s71 = sadd.s32 %s70, 1
      %p74 = scmp.eq.s32.totalorder %s15, 1
      %p75 = scmp.ne.s32.totalorder %s70, %s72
      %p76 = scmp.eq.s32.totalorder %s15, 0
      %p77 = por %p75, %p76
      %p78 = scmp.ne.s32.totalorder %s70, %s72
      %p79 = scmp.eq.s32.totalorder %s20, 1
      %p80 = por %p78, %p79
      %p81 = scmp.ne.s32.totalorder %s72, %s73
      %p82 = scmp.eq.s32.totalorder %s20, 0
      %p83 = por %p81, %p82
      %p84 = scmp.ne.s32.totalorder %s72, %s73
      %p85 = scmp.eq.s32.totalorder %s21, 1
      %p86 = por %p84, %p85
      %p88 = scmp.ne.s32.totalorder %s73, %s87
      %p89 = scmp.eq.s32.totalorder %s21, 0
      %p90 = por %p88, %p89
      %s91 = ssub.s32 %s15, %s22
      %p92 = scmp.eq.s32.totalorder %s91, 0
      %s94 = sadd.s32 %s93, 1
      %s95 = scalar_select %p92, %s93, %s94
      %p98 = pneg %p92
      %p99 = scmp.eq.s32.totalorder %s15, 1
      %p100 = por %p98, %p99
      %p101 = scmp.ne.s32.totalorder %s93, %s96
      %p102 = scmp.eq.s32.totalorder %s15, 0
      %p103 = por %p101, %p102
      %p104 = scmp.ne.s32.totalorder %s93, %s96
      %p105 = scmp.eq.s32.totalorder %s20, 1
      %p106 = por %p104, %p105
      %p107 = scmp.ne.s32.totalorder %s96, %s97
      %p108 = scmp.eq.s32.totalorder %s20, 0
      %p109 = por %p107, %p108
      %p110 = scmp.ne.s32.totalorder %s96, %s97
      %p111 = scmp.eq.s32.totalorder %s21, 1
      %p112 = por %p110, %p111
      %p114 = scmp.ne.s32.totalorder %s97, %s113
      %p115 = scmp.eq.s32.totalorder %s21, 0
      %p116 = por %p114, %p115
      %p117 = scmp.le.s32.totalorder 1, %s15
      %p118 = scmp.lt.s32.totalorder %s15, 3
      %p119 = pnand %p117, %p118
      %p120 = pneg %p119
      // Predicated region
      $region9: #{tpu_custom_call.1} parent=5 // pred_check
        _
      $region10: #{tpu_custom_call.1} parent=5 // pred_check_branch
        %122 = sbr.rel (%p119) target = $region12
      $region11: #{tpu_custom_call.1} parent=5 // pred_region
        %s123 = ssub.s32 %s15, 1
        // Predicated region
        $region13: #{tpu_custom_call.1} parent=11 // pred_check
          %p124 = pneg %p62
        $region14: #{tpu_custom_call.1} parent=11 // pred_check_branch
          %126 = sbr.rel (%p124) target = $region16
        $region15: #{tpu_custom_call.1} parent=11 // pred_region
          _
        $region16: #{tpu_custom_call.1} parent=11 // pred_fallthru
          _
        // Predicated region
        $region17: #{tpu_custom_call.1} parent=11 // pred_check
          %p127 = pneg %p83
        $region18: #{tpu_custom_call.1} parent=11 // pred_check_branch
          %129 = sbr.rel (%p127) target = $region20
        $region19: #{tpu_custom_call.1} parent=11 // pred_region
          _
        $region20: #{tpu_custom_call.1} parent=11 // pred_fallthru
          _
      $region12: #{tpu_custom_call.1} parent=5 // pred_fallthru
        _
      %p130 = scmp.lt.s32.totalorder %s15, 2
      // Predicated region
      $region21: #{tpu_custom_call.1} parent=5 // pred_check
        %p131 = pneg %p130
      $region22: #{tpu_custom_call.1} parent=5 // pred_check_branch
        %133 = sbr.rel (%p131) target = $region24
      $region23: #{tpu_custom_call.1} parent=5 // pred_region
        // Predicated region
        $region25: #{tpu_custom_call.1} parent=23 // pred_check
          %p134 = pneg %p35
        $region26: #{tpu_custom_call.1} parent=23 // pred_check_branch
          %136 = sbr.rel (%p134) target = $region28
        $region27: #{tpu_custom_call.1} parent=23 // pred_region
          %s137 = sand.u32 %s25, 1
          %s138 = scalar_lea.sflag [#allocation3], %s137
          %s139 = sand.u32 %s25, 1
          %s140 = smul.addr %s139, 64
          %s141 = scalar_lea.vmem [#allocation2], %s140
          %s142 = smul.u32 4, %s15
          %s144 = ssub.s32 1024, 1024
          %145 = vsyncadd %s138, %s144
          %s146 = smul.addr %s142, 2
          %s147 = smul.addr %s146, 128
          %s148 = scalar_lea.hbm %s0, %s147
          %s149 = sshll.u32 %s141, 4
          %s150 = int_to_ptr.vmem [resolvable:$true] %s149
          %155 = dma.hbm_to_vmem [thread:$0]  %s148, 1024, %s150, %s138, 128, 128, 8
        $region28: #{tpu_custom_call.1} parent=23 // pred_fallthru
          _
      $region24: #{tpu_custom_call.1} parent=5 // pred_fallthru
        _
      %p156 = scmp.le.s32.totalorder 1, %s15
      %p157 = scmp.lt.s32.totalorder %s15, 3
      %p158 = pnand %p156, %p157
      %p159 = pneg %p158
      // Predicated region
      $region29: #{tpu_custom_call.1} parent=5 // pred_check
        _
      $region30: #{tpu_custom_call.1} parent=5 // pred_check_branch
        %161 = sbr.rel (%p158) target = $region32
      $region31: #{tpu_custom_call.1} parent=5 // pred_region
        %s162 = ssub.s32 %s15, 1
        %s163 = sand.u32 %s28, 1
        %s164 = scalar_lea.sflag [#allocation3], %s163
        %s165 = sand.u32 %s28, 1
        %s166 = smul.addr %s165, 64
        %s167 = scalar_lea.vmem [#allocation2], %s166
        // Predicated region
        $region33: #{tpu_custom_call.1} parent=31 // pred_check
          %p168 = pneg %p41
        $region34: #{tpu_custom_call.1} parent=31 // pred_check_branch
          %170 = sbr.rel (%p168) target = $region36
        $region35: #{tpu_custom_call.1} parent=31 // pred_region
          %171 = dma.done %s164, 1024
        $region36: #{tpu_custom_call.1} parent=31 // pred_fallthru
          _
        %s172 = sand.u32 %s28, 1
        %s173 = scalar_lea.sflag [#allocation3], %s172
        %s174 = sand.u32 %s28, 1
        %s175 = smul.addr %s174, 64
        %s176 = scalar_lea.vmem [#allocation2], %s175
        %p177 = pneg %p41
        %p178 = pneg %p38
        %p179 = pneg %p62
        %p180 = pneg %p59
        %p181 = pneg %p83
        %p182 = pneg %p80
        %p183 = pneg %p109
        %p184 = pneg %p106
        %s185 = sand.u32 %s96, 1
        %s186 = scalar_lea.sflag [#allocation4], %s185
        %s187 = sand.u32 %s96, 1
        %s188 = smul.addr %s187, 24
        %s189 = scalar_lea.vmem [#allocation5], %s188
        %s190 = smul.u32 4, %s20
        %v191 = vld [vmem:[%s167] sm:$0xff]
        %v192 = vld [vmem:[%s167 + $0x8] sm:$0xff]
        %v193 = vld [vmem:[%s167 + $0x10] sm:$0xff]
        %v194 = vld [vmem:[%s167 + $0x18] sm:$0xff]
        %v195 = vld [vmem:[%s167 + $0x20] sm:$0xff]
        %v196 = vld [vmem:[%s167 + $0x28] sm:$0xff]
        %v197 = vld [vmem:[%s167 + $0x30] sm:$0xff]
        %v198 = vld [vmem:[%s167 + $0x38] sm:$0xff]
        %v199 = vld [vmem:[%s1] sm:$0xff]
        %v200 = vld [vmem:[%s1 + $0x8] sm:$0xff]
        %vm201 = vcmask 130048
        %v203 = vsel %vm201, %v191, 0
        %v206 = vsel %vm201, %v192, 0
        %v209 = vsel %vm201, %v193, 0
        %v212 = vsel %vm201, %v194, 0
        %v215 = vsel %vm201, %v195, 0
        %v218 = vsel %vm201, %v196, 0
        %v221 = vsel %vm201, %v197, 0
        %v224 = vsel %vm201, %v198, 0
        %226 = vmatprep.subr.mxu0 0.0
        %227 = vmatpush1.msra.mxu0 %v199
        %228 = vmatprep.subr.mxu0 0.0
        %229 = vmatpush1.msra.mxu0 %v200
        %230 = vmatprep.subr.mxu0 0.0
        %231 = vmatpush1.msra.mxu0 0.0
        %232 = vmatprep.subr.mxu0 0.0
        %233 = vmatpush1.msra.mxu0 0.0
        %234 = vmatprep.subr.mxu0 0.0
        %235 = vmatpush1.msra.mxu0 0.0
        %236 = vmatprep.subr.mxu0 0.0
        %237 = vmatpush1.msra.mxu0 0.0
        %238 = vmatprep.subr.mxu0 0.0
        %239 = vmatpush1.msra.mxu0 0.0
        %240 = vmatprep.subr.mxu0 0.0
        %241 = vmatpush1.msra.mxu0 0.0
        %242 = vmatprep.subr.mxu0 0.0
        %243 = vmatpush1.msra.mxu0 0.0
        %244 = vmatprep.subr.mxu0 0.0
        %245 = vmatpush1.msra.mxu0 0.0
        %246 = vmatprep.subr.mxu0 0.0
        %247 = vmatpush1.msra.mxu0 0.0
        %248 = vmatprep.subr.mxu0 0.0
        %249 = vmatpush1.msra.mxu0 0.0
        %250 = vmatprep.subr.mxu0 0.0
        %251 = vmatpush1.msra.mxu0 0.0
        %252 = vmatprep.subr.mxu0 0.0
        %253 = vmatpush1.msra.mxu0 0.0
        %254 = vmatprep.subr.mxu0 0.0
        %255 = vmatpush1.msra.mxu0 0.0
        %256 = vmatprep.subr.mxu0 0.0
        %257 = vmatpush1.msra.mxu0 0.0
        %258 = vmatprep.subr.mxu0 0.0
        %259 = vmatpush1.msra.mxu0 0.0
        %260 = vmatprep.subr.mxu0 0.0
        %261 = vmatpush1.msra.mxu0 0.0
        %262 = vmatprep.subr.mxu0 0.0
        %263 = vmatpush1.msra.mxu0 0.0
        %264 = vmatprep.subr.mxu0 0.0
        %265 = vmatpush1.msra.mxu0 0.0
        %266 = vmatprep.subr.mxu0 0.0
        %267 = vmatpush1.msra.mxu0 0.0
        %268 = vmatprep.subr.mxu0 0.0
        %269 = vmatpush1.msra.mxu0 0.0
        %270 = vmatprep.subr.mxu0 0.0
        %271 = vmatpush1.msra.mxu0 0.0
        %272 = vmatprep.subr.mxu0 0.0
        %273 = vmatpush1.msra.mxu0 0.0
        %274 = vmatprep.subr.mxu0 0.0
        %275 = vmatpush1.msra.mxu0 0.0
        %276 = vmatprep.subr.mxu0 0.0
        %277 = vmatpush1.msra.mxu0 0.0
        %278 = vmatprep.subr.mxu0 0.0
        %279 = vmatpush1.msra.mxu0 0.0
        %280 = vmatprep.subr.mxu0 0.0
        %281 = vmatpush1.msra.mxu0 0.0
        %282 = vmatprep.subr.mxu0 0.0
        %283 = vmatpush1.msra.mxu0 0.0
        %284 = vmatprep.subr.mxu0 0.0
        %285 = vmatpush1.msra.mxu0 0.0
        %286 = vmatprep.subr.mxu0 0.0
        %287 = vmatpush1.msra.mxu0 0.0
        %288 = vmatprep.subr.mxu0 0.0
        %289 = vmatpush1.msra.mxu0 0.0
        %290 = vmatprep.mubr.f32.mxu0 0.0
        %291 = vmatmul.mubr.f32.gmra.mrb[0].mxu0 %v203
        %v292 = vpop.f32.mrb[0].mxu0
        %v293 = vadd.f32 0.0, %v292
        %v294 = vpop.f32.mrb[0].mxu0
        %295 = vmatprep.mubr.f32.mxu0 0.0
        %296 = vmatmul.mubr.f32.gmra.mrb[0].mxu0 %v206
        %v297 = vpop.f32.mrb[0].mxu0
        %v298 = vadd.f32 0.0, %v297
        %v299 = vpop.f32.mrb[0].mxu0
        %300 = vmatprep.mubr.f32.mxu0 0.0
        %301 = vmatmul.mubr.f32.gmra.mrb[0].mxu0 %v209
        %v302 = vpop.f32.mrb[0].mxu0
        %v303 = vadd.f32 0.0, %v302
        %v304 = vpop.f32.mrb[0].mxu0
        %305 = vmatprep.mubr.f32.mxu0 0.0
        %306 = vmatmul.mubr.f32.gmra.mrb[0].mxu0 %v212
        %v307 = vpop.f32.mrb[0].mxu0
        %v308 = vadd.f32 0.0, %v307
        %v309 = vpop.f32.mrb[0].mxu0
        %310 = vmatprep.mubr.f32.mxu0 0.0
        %311 = vmatmul.mubr.f32.gmra.mrb[0].mxu0 %v215
        %v312 = vpop.f32.mrb[0].mxu0
        %v313 = vadd.f32 0.0, %v312
        %v314 = vpop.f32.mrb[0].mxu0
        %315 = vmatprep.mubr.f32.mxu0 0.0
        %316 = vmatmul.mubr.f32.gmra.mrb[0].mxu0 %v218
        %v317 = vpop.f32.mrb[0].mxu0
        %v318 = vadd.f32 0.0, %v317
        %v319 = vpop.f32.mrb[0].mxu0
        %320 = vmatprep.mubr.f32.mxu0 0.0
        %321 = vmatmul.mubr.f32.gmra.mrb[0].mxu0 %v221
        %v322 = vpop.f32.mrb[0].mxu0
        %v323 = vadd.f32 0.0, %v322
        %v324 = vpop.f32.mrb[0].mxu0
        %325 = vmatprep.mubr.f32.mxu0 0.0
        %326 = vmatmul.mubr.f32.gmra.mrb[0].mxu0 %v224
        %v327 = vpop.f32.mrb[0].mxu0
        %v328 = vadd.f32 0.0, %v327
        %v329 = vpop.f32.mrb[0].mxu0
        %330 = vdwg.mxu0
        %333 = vrot.lane.b32.xlu0 %v303, 24
        %v334 = vpop.permute.xlu0 %333
        %335 = vrot.lane.b32.xlu0 %v308, 24
        %v336 = vpop.permute.xlu0 %335
        %341 = vrot.lane.b32.xlu0 %v313, 48
        %v342 = vpop.permute.xlu0 %341
        %343 = vrot.lane.b32.xlu0 %v318, 48
        %v344 = vpop.permute.xlu0 %343
        %349 = vrot.lane.b32.xlu0 %v323, 72
        %v350 = vpop.permute.xlu0 %349
        %351 = vrot.lane.b32.xlu0 %v328, 72
        %v352 = vpop.permute.xlu0 %351
        %vm355 = vcmask 195584
        %v356 = vsel %vm355, %v293, %v334
        %v357 = vsel %vm355, %v298, %v336
        %vm358 = vcmask 392192
        %v359 = vsel %vm358, %v356, %v342
        %v360 = vsel %vm358, %v357, %v344
        %vm361 = vcmask 588800
        %v362 = vsel %vm361, %v359, %v350
        %v363 = vsel %vm361, %v360, %v352
        %v364 = vld [vmem:[%s2] sm:$0xff]
        %v365 = vld [vmem:[%s2 + $0x8] sm:$0xff]
        %v366 = vld [vmem:[%s2 + $0x10] sm:$0xff]
        %v368 = vsel %vm201, %v364, 0
        %v371 = vsel %vm201, %v365, 0
        %v374 = vsel %vm201, %v366, 0
        %376 = vmatprep.subr.mxu0 0.0
        %377 = vmatpush1.msra.mxu0 %v362
        %378 = vmatprep.subr.mxu0 0.0
        %379 = vmatpush1.msra.mxu0 %v363
        %380 = vmatprep.subr.mxu0 0.0
        %381 = vmatpush1.msra.mxu0 0.0
        %382 = vmatprep.subr.mxu0 0.0
        %383 = vmatpush1.msra.mxu0 0.0
        %384 = vmatprep.subr.mxu0 0.0
        %385 = vmatpush1.msra.mxu0 0.0
        %386 = vmatprep.subr.mxu0 0.0
        %387 = vmatpush1.msra.mxu0 0.0
        %388 = vmatprep.subr.mxu0 0.0
        %389 = vmatpush1.msra.mxu0 0.0
        %390 = vmatprep.subr.mxu0 0.0
        %391 = vmatpush1.msra.mxu0 0.0
        %392 = vmatprep.subr.mxu0 0.0
        %393 = vmatpush1.msra.mxu0 0.0
        %394 = vmatprep.subr.mxu0 0.0
        %395 = vmatpush1.msra.mxu0 0.0
        %396 = vmatprep.subr.mxu0 0.0
        %397 = vmatpush1.msra.mxu0 0.0
        %398 = vmatprep.subr.mxu0 0.0
        %399 = vmatpush1.msra.mxu0 0.0
        %400 = vmatprep.subr.mxu0 0.0
        %401 = vmatpush1.msra.mxu0 0.0
        %402 = vmatprep.subr.mxu0 0.0
        %403 = vmatpush1.msra.mxu0 0.0
        %404 = vmatprep.subr.mxu0 0.0
        %405 = vmatpush1.msra.mxu0 0.0
        %406 = vmatprep.subr.mxu0 0.0
        %407 = vmatpush1.msra.mxu0 0.0
        %408 = vmatprep.subr.mxu0 0.0
        %409 = vmatpush1.msra.mxu0 0.0
        %410 = vmatprep.subr.mxu0 0.0
        %411 = vmatpush1.msra.mxu0 0.0
        %412 = vmatprep.subr.mxu0 0.0
        %413 = vmatpush1.msra.mxu0 0.0
        %414 = vmatprep.subr.mxu0 0.0
        %415 = vmatpush1.msra.mxu0 0.0
        %416 = vmatprep.subr.mxu0 0.0
        %417 = vmatpush1.msra.mxu0 0.0
        %418 = vmatprep.subr.mxu0 0.0
        %419 = vmatpush1.msra.mxu0 0.0
        %420 = vmatprep.subr.mxu0 0.0
        %421 = vmatpush1.msra.mxu0 0.0
        %422 = vmatprep.subr.mxu0 0.0
        %423 = vmatpush1.msra.mxu0 0.0
        %424 = vmatprep.subr.mxu0 0.0
        %425 = vmatpush1.msra.mxu0 0.0
        %426 = vmatprep.subr.mxu0 0.0
        %427 = vmatpush1.msra.mxu0 0.0
        %428 = vmatprep.subr.mxu0 0.0
        %429 = vmatpush1.msra.mxu0 0.0
        %430 = vmatprep.subr.mxu0 0.0
        %431 = vmatpush1.msra.mxu0 0.0
        %432 = vmatprep.subr.mxu0 0.0
        %433 = vmatpush1.msra.mxu0 0.0
        %434 = vmatprep.subr.mxu0 0.0
        %435 = vmatpush1.msra.mxu0 0.0
        %436 = vmatprep.subr.mxu0 0.0
        %437 = vmatpush1.msra.mxu0 0.0
        %438 = vmatprep.subr.mxu0 0.0
        %439 = vmatpush1.msra.mxu0 0.0
        %440 = vmatprep.mubr.f32.mxu0 0.0
        %441 = vmatmul.mubr.f32.gmra.mrb[0].mxu0 %v368
        %v442 = vpop.f32.mrb[0].mxu0
        %v443 = vadd.f32 0.0, %v442
        %v444 = vpop.f32.mrb[0].mxu0
        %445 = vmatprep.mubr.f32.mxu0 0.0
        %446 = vmatmul.mubr.f32.gmra.mrb[0].mxu0 %v371
        %v447 = vpop.f32.mrb[0].mxu0
        %v448 = vadd.f32 0.0, %v447
        %v449 = vpop.f32.mrb[0].mxu0
        %450 = vmatprep.mubr.f32.mxu0 0.0
        %451 = vmatmul.mubr.f32.gmra.mrb[0].mxu0 %v374
        %v452 = vpop.f32.mrb[0].mxu0
        %v453 = vadd.f32 0.0, %v452
        %v454 = vpop.f32.mrb[0].mxu0
        %455 = vdwg.mxu0
        %vm456 = vcmask 785408
        %457 = vst.msk [vmem:[%s189] sm:$0xff] %vm456, %v443
        %458 = vst.msk [vmem:[%s189 + $0x8] sm:$0xff] %vm456, %v448
        %459 = vst.msk [vmem:[%s189 + $0x10] sm:$0xff] %vm456, %v453
        %s460 = sand.u32 %s96, 1
        %s461 = scalar_lea.sflag [#allocation4], %s460
        %s462 = sand.u32 %s96, 1
        %s463 = smul.addr %s462, 24
        %s464 = scalar_lea.vmem [#allocation5], %s463
        // Predicated region
        $region37: #{tpu_custom_call.1} parent=31 // pred_check
          %p465 = pneg %p106
        $region38: #{tpu_custom_call.1} parent=31 // pred_check_branch
          %467 = sbr.rel (%p465) target = $region40
        $region39: #{tpu_custom_call.1} parent=31 // pred_region
          %s469 = ssub.s32 384, 384
          %470 = vsyncadd %s461, %s469
          %s471 = smul.addr %s20, 3
          %s472 = smul.addr %s471, 128
          %s473 = scalar_lea.hbm %s3, %s472
          %s474 = sshll.u32 %s464, 4
          %s475 = int_to_ptr.vmem [resolvable:$true] %s474
          %480 = dma.vmem_to_hbm [thread:$0]  %s475, 384, %s473, %s461, 128, 128, 8
        $region40: #{tpu_custom_call.1} parent=31 // pred_fallthru
          _
      $region32: #{tpu_custom_call.1} parent=5 // pred_fallthru
        _
      %p481 = scmp.le.s32.totalorder 2, %s15
      // Predicated region
      $region41: #{tpu_custom_call.1} parent=5 // pred_check
        %p482 = pneg %p481
      $region42: #{tpu_custom_call.1} parent=5 // pred_check_branch
        %484 = sbr.rel (%p482) target = $region44
      $region43: #{tpu_custom_call.1} parent=5 // pred_region
        %s485 = ssub.s32 %s15, 2
        // Predicated region
        $region45: #{tpu_custom_call.1} parent=43 // pred_check
          %p486 = pneg %p112
        $region46: #{tpu_custom_call.1} parent=43 // pred_check_branch
          %488 = sbr.rel (%p486) target = $region48
        $region47: #{tpu_custom_call.1} parent=43 // pred_region
          %s489 = sand.u32 %s97, 1
          %s490 = scalar_lea.sflag [#allocation4], %s489
          %s491 = sand.u32 %s97, 1
          %s492 = smul.addr %s491, 24
          %s493 = scalar_lea.vmem [#allocation5], %s492
          %494 = dma.done %s490, 384
        $region48: #{tpu_custom_call.1} parent=43 // pred_fallthru
          _
      $region44: #{tpu_custom_call.1} parent=5 // pred_fallthru
        _
    $region6: #{tpu_custom_call.1} parent=1 // loop_footer
      %s19 = sadd.s32 1, %s15
    $region7: #{tpu_custom_call.1} parent=1 // loop_footer_branch
      %14 = sbr.rel target = $region3
    $region8: #{tpu_custom_call.1} parent=1 // loop_exit
      _
    %495 = vsyncpa [#allocation3], 1
    %s496 = scalar_lea.sflag [#allocation3], 1
    %497 = vsyncpa %s496, 1
    %498 = vsyncpa [#allocation4], 1
    %s499 = scalar_lea.sflag [#allocation4], 1
    %500 = vsyncpa %s499, 1

</llo_original>
